<compile_context>
chip_gen: v7x
topology: tpu7x:2x2x1
jax: 0.10.0
libtpu: 0.0.40
codegen_flags: <defaults>
</compile_context>

<pallas_src>
import functools

import jax
import jax.numpy as jnp
from jax.experimental import pallas as pl
from jax.experimental.pallas import tpu as pltpu

_MIB = 1024 * 1024


def _round_up(x, m):
    return (x + m - 1) // m * m


def _vmem_capacity_bytes():
    """Per-TensorCore VMEM capacity; falls back to 64 MiB (safe on every chip)."""
    try:
        cap = int(pltpu.get_tpu_info().vmem_capacity_bytes)
        if cap > 0:
            return cap
    except Exception:
        pass
    return 64 * _MIB


def _bert_output_kernel(x_ref, res_ref, w_ref, b_ref, g_ref, beta_ref, o_ref,
                        *, eps):
    # Dense: [tm, I] @ [I, H] on the MXU, f32 accumulation.
    h = jnp.dot(x_ref[...], w_ref[...], preferred_element_type=jnp.float32)
    h = h + b_ref[...].astype(jnp.float32)

    # Dropout: identity in eval mode.
    # TODO(synk): training-mode dropout (pltpu.prng_random_bits mask) not wired in.

    # Residual add.
    h = h + res_ref[...].astype(jnp.float32)

    # LayerNorm over the hidden (lane) axis, eps = 1e-12, all in f32.
    # Cross-lane reductions run on the XLU and rsqrt on the EUP -> hidden under
    # the MXU matmul, so the epilogue is left as-is per the perf review.
    mean = jnp.mean(h, axis=-1, keepdims=True)
    centered = h - mean
    var = jnp.mean(centered * centered, axis=-1, keepdims=True)
    normed = centered * jax.lax.rsqrt(var + eps)
    out = normed * g_ref[...].astype(jnp.float32) + beta_ref[...].astype(jnp.float32)
    o_ref[...] = out.astype(o_ref.dtype)


def _choose_row_tile(M, I, H, esz_x, esz_r, esz_o, esz_w, budget, row_tile):
    """Largest MXU-aligned row tile whose VMEM footprint fits `budget`."""
    # Resident (single-buffered) weight + bias/gamma/beta; row tiles double-buffered.
    const_bytes = I * H * esz_w + 3 * H * 4

    def est(t):
        return const_bytes + 2 * t * (I * esz_x + H * (esz_r + esz_o))

    if row_tile is None:
        # 128 MiB chips (v5e/v6e) comfortably hold 512-row tiles; 64 MiB/TC (v7x) 256.
        row_tile = 512 if budget >= 80 * _MIB else 256

    tm = min(row_tile, _round_up(M, 8))
    # Full MXU passes: multiples of 256 for large tiles, multiples of 8 otherwise.
    tm = (tm // 256) * 256 if tm >= 256 else _round_up(tm, 8)

    # Shrink until the footprint fits (weight stays resident; floor at 8 rows).
    while tm > 8 and est(tm) > budget:
        tm = tm - 256 if tm > 256 else _round_up(max(tm // 2, 8), 8)
    # TODO(synk): if even est(8) exceeds the budget (huge I*H weight), switch to a
    # K-tiled grid with an f32 VMEM accumulator instead of a resident weight.

    # Megacore: with one "parallel" grid axis, make sure both v7x TCs get work.
    if tm >= 512 and pl.cdiv(M, tm) == 1:
        tm = max(256, ((tm // 2) // 256) * 256)

    return tm, est(tm)


def bert_output(hidden_states, input_tensor, weight_t, bias, gamma, beta,
                *, eps=1e-12, row_tile=None, out_dtype=None):
    """Fused BertOutput forward.

    hidden_states: [B, S, I]   (output of the intermediate GELU layer)
    input_tensor : [B, S, H]   (residual)
    weight_t     : [I, H]      dense weight, ALREADY transposed from the PyTorch
                               [H, I] layout (transpose once, outside this call).
    bias, gamma, beta: [H]

    Production path: bf16 hidden_states / input_tensor / weight_t (fp8 weight on
    v7x if quantizing -- no int8 MXU path there); matmul accumulation and the
    LayerNorm always run in f32 inside the kernel.
    """
    B, S, I = hidden_states.shape
    Iw, H = weight_t.shape
    assert Iw == I, "weight_t must be [intermediate, hidden] (pre-transposed)"
    assert input_tensor.shape == (B, S, H)

    out_dtype = out_dtype or input_tensor.dtype
    M = B * S

    x2d = hidden_states.reshape(M, I)
    r2d = input_tensor.reshape(M, H)
    b2d = bias.reshape(1, H)
    g2d = gamma.reshape(1, H)
    beta2d = beta.reshape(1, H)

    cap = _vmem_capacity_bytes()
    budget = int(cap * 0.70)          # headroom for compiler-internal scratch
    tm, est = _choose_row_tile(M, I, H,
                               x2d.dtype.itemsize, r2d.dtype.itemsize,
                               jnp.dtype(out_dtype).itemsize,
                               weight_t.dtype.itemsize,
                               budget, row_tile)
    grid = (pl.cdiv(M, tm),)          # partial last tile masked by Pallas (no pad/slice)

    vmem_limit = min(int(cap * 0.90), max(est * 5 // 4, 32 * _MIB))
    vmem_limit = max(vmem_limit, est + 2 * _MIB)   # never clamp below the footprint

    kernel = functools.partial(_bert_output_kernel, eps=eps)

    def _call(single_buffer_consts):
        # Grid-invariant operands: one VMEM buffer, fetched once, never re-fetched.
        const = dict(pipeline_mode=pl.Buffered(1)) if single_buffer_consts else {}
        return pl.pallas_call(
            kernel,
            out_shape=jax.ShapeDtypeStruct((M, H), out_dtype),
            grid=grid,
            in_specs=[
                pl.BlockSpec((tm, I), lambda i: (i, 0)),          # activation rows
                pl.BlockSpec((tm, H), lambda i: (i, 0)),          # residual rows
                pl.BlockSpec((I, H), lambda i: (0, 0), **const),  # weight (resident)
                pl.BlockSpec((1, H), lambda i: (0, 0), **const),  # bias
                pl.BlockSpec((1, H), lambda i: (0, 0), **const),  # LN gamma
                pl.BlockSpec((1, H), lambda i: (0, 0), **const),  # LN beta
            ],
            out_specs=pl.BlockSpec((tm, H), lambda i: (i, 0)),
            compiler_params=pltpu.CompilerParams(
                dimension_semantics=("parallel",),
                vmem_limit_bytes=int(vmem_limit),
            ),
        )(x2d, r2d, weight_t, b2d, g2d, beta2d)

    try:
        out2d = _call(True)
    except Exception:
        # Fallback for jax versions without BlockSpec pipeline_mode / Buffered(1);
        # identical computation, just double-buffers the constant operands.
        out2d = _call(False)

    return out2d.reshape(B, S, H)


def _reference(hidden_states, input_tensor, weight_t, bias, gamma, beta, eps=1e-12):
    """Pure-JAX reference matching the kernel's mixed-precision semantics."""
    h = jnp.dot(hidden_states, weight_t, preferred_element_type=jnp.float32)
    h = h + bias.astype(jnp.float32) + input_tensor.astype(jnp.float32)
    mean = jnp.mean(h, axis=-1, keepdims=True)
    var = jnp.mean((h - mean) ** 2, axis=-1, keepdims=True)
    return (h - mean) * jax.lax.rsqrt(var + eps) * gamma + beta


if __name__ == "__main__":
    # Small config consistent with BertOutput: intermediate=64, hidden=32.
    B, S, I, H = 2, 8, 64, 32
    key = jax.random.PRNGKey(0)
    k1, k2, k3, k4 = jax.random.split(key, 4)

    hidden_states = jax.random.normal(k1, (B, S, I), dtype=jnp.float32)
    input_tensor = jax.random.normal(k2, (B, S, H), dtype=jnp.float32)

    # Parameters in PyTorch layout: Linear weight [H, I], bias [H]; LN gamma/beta [H].
    weight = jax.random.normal(k3, (H, I), dtype=jnp.float32) * (1.0 / jnp.sqrt(I))
    bias = jax.random.normal(k4, (H,), dtype=jnp.float32) * 0.02
    gamma = jnp.ones((H,), dtype=jnp.float32)
    beta = jnp.zeros((H,), dtype=jnp.float32)

    # Pre-transpose the weight ONCE outside the kernel call.
    weight_t = jnp.asarray(weight.T)  # [I, H]

    # --- f32 path, tight check ---
    out = bert_output(hidden_states, input_tensor, weight_t, bias, gamma, beta)
    out = jax.block_until_ready(out)
    ref = _reference(hidden_states, input_tensor, weight_t, bias, gamma, beta)
    assert jnp.allclose(out, ref, atol=1e-5, rtol=1e-5), "f32 mismatch vs reference"

    # --- multi-step grid (row_tile=8 -> 2 pipelined steps) ---
    out_multi = bert_output(hidden_states, input_tensor, weight_t, bias, gamma, beta,
                            row_tile=8)
    out_multi = jax.block_until_ready(out_multi)
    assert jnp.allclose(out_multi, ref, atol=1e-5, rtol=1e-5), "multi-step mismatch"

    # --- ragged row count (M=5: partial last tile, masked output DMA) ---
    hs_r = hidden_states[:1, :5]
    res_r = input_tensor[:1, :5]
    out_r = jax.block_until_ready(
        bert_output(hs_r, res_r, weight_t, bias, gamma, beta))
    ref_r = _reference(hs_r, res_r, weight_t, bias, gamma, beta)
    assert jnp.allclose(out_r, ref_r, atol=1e-5, rtol=1e-5), "ragged mismatch"

    # --- bf16 production path: bf16 I/O, f32 accumulate + LN inside the kernel ---
    hs_bf = hidden_states.astype(jnp.bfloat16)
    res_bf = input_tensor.astype(jnp.bfloat16)
    wt_bf = weight_t.astype(jnp.bfloat16)
    out_bf = bert_output(hs_bf, res_bf, wt_bf, bias, gamma, beta,
                         out_dtype=jnp.bfloat16)
    out_bf = jax.block_until_ready(out_bf)
    ref_bf = _reference(hs_bf, res_bf, wt_bf, bias, gamma, beta).astype(jnp.bfloat16)
    assert jnp.allclose(out_bf.astype(jnp.float32), ref_bf.astype(jnp.float32),
                        atol=3e-2, rtol=3e-2), "bf16 path mismatch vs bf16 reference"

    print("KERNEL_OK")
</pallas_src>

<mosaic_0001>
module attributes {stable_mosaic.version = 11 : i64} {
  func.func @_bert_output_kernel(%arg0: i32, %arg1: memref<16x64xf32, #tpu.memory_space<vmem>>, %arg2: memref<16x32xf32, #tpu.memory_space<vmem>>, %arg3: memref<64x32xf32, #tpu.memory_space<vmem>>, %arg4: memref<1x32xf32, #tpu.memory_space<vmem>>, %arg5: memref<1x32xf32, #tpu.memory_space<vmem>>, %arg6: memref<1x32xf32, #tpu.memory_space<vmem>>, %arg7: memref<16x32xf32, #tpu.memory_space<vmem>>) attributes {dimension_semantics = [#tpu.dimension_semantics<parallel>], iteration_bounds = array<i64: 1>, scalar_prefetch = 0 : i64, scratch_operands = 0 : i64, tpu.core_type = #tpu.core_type<tc>, window_params = [{transform_indices = @transform_0, window_bounds = array<i64: 16, 64>}, {transform_indices = @transform_1, window_bounds = array<i64: 16, 32>}, {pipeline_mode = #tpu.pipeline_mode<synchronous>, transform_indices = @transform_2, window_bounds = array<i64: 64, 32>}, {pipeline_mode = #tpu.pipeline_mode<synchronous>, transform_indices = @transform_3, window_bounds = array<i64: 1, 32>}, {pipeline_mode = #tpu.pipeline_mode<synchronous>, transform_indices = @transform_4, window_bounds = array<i64: 1, 32>}, {pipeline_mode = #tpu.pipeline_mode<synchronous>, transform_indices = @transform_5, window_bounds = array<i64: 1, 32>}, {transform_indices = @transform_6, window_bounds = array<i64: 16, 32>}]} {
    %c0 = arith.constant 0 : index
    %c0_0 = arith.constant 0 : index
    %0 = vector.load %arg1[%c0, %c0_0] : memref<16x64xf32, #tpu.memory_space<vmem>>, vector<16x64xf32>
    %c0_1 = arith.constant 0 : index
    %c0_2 = arith.constant 0 : index
    %1 = vector.load %arg3[%c0_1, %c0_2] : memref<64x32xf32, #tpu.memory_space<vmem>>, vector<64x32xf32>
    %cst = arith.constant dense<0.000000e+00> : vector<16x32xf32>
    %2 = tpu.matmul %0, %1, %cst {dimension_numbers = #tpu.dot_dimension_numbers<[1], [0], [0], [1], [0, 0, 1, 1], [], []>} : vector<16x64xf32>, vector<64x32xf32>, vector<16x32xf32> -> vector<16x32xf32>
    %c0_3 = arith.constant 0 : index
    %c0_4 = arith.constant 0 : index
    %3 = vector.load %arg4[%c0_3, %c0_4] : memref<1x32xf32, #tpu.memory_space<vmem>>, vector<1x32xf32>
    %4 = vector.broadcast %3 : vector<1x32xf32> to vector<16x32xf32>
    %5 = arith.addf %2, %4 : vector<16x32xf32>
    %c0_5 = arith.constant 0 : index
    %c0_6 = arith.constant 0 : index
    %6 = vector.load %arg2[%c0_5, %c0_6] : memref<16x32xf32, #tpu.memory_space<vmem>>, vector<16x32xf32>
    %7 = arith.addf %5, %6 : vector<16x32xf32>
    %cst_7 = arith.constant dense<0.000000e+00> : vector<16xf32>
    %8 = vector.multi_reduction <add>, %7, %cst_7 [1] : vector<16x32xf32> to vector<16xf32>
    %9 = vector.shape_cast %8 : vector<16xf32> to vector<16x1xf32>
    %cst_8 = arith.constant 3.200000e+01 : f32
    %10 = vector.broadcast %cst_8 : f32 to vector<16x1xf32>
    %11 = arith.divf %9, %10 : vector<16x1xf32>
    %12 = vector.broadcast %11 : vector<16x1xf32> to vector<16x32xf32>
    %13 = arith.subf %7, %12 : vector<16x32xf32>
    %14 = arith.mulf %13, %13 : vector<16x32xf32>
    %cst_9 = arith.constant dense<0.000000e+00> : vector<16xf32>
    %15 = vector.multi_reduction <add>, %14, %cst_9 [1] : vector<16x32xf32> to vector<16xf32>
    %16 = vector.shape_cast %15 : vector<16xf32> to vector<16x1xf32>
    %cst_10 = arith.constant 3.200000e+01 : f32
    %17 = vector.broadcast %cst_10 : f32 to vector<16x1xf32>
    %18 = arith.divf %16, %17 : vector<16x1xf32>
    %cst_11 = arith.constant 9.99999996E-13 : f32
    %19 = vector.broadcast %cst_11 : f32 to vector<16x1xf32>
    %20 = arith.addf %18, %19 : vector<16x1xf32>
    %21 = math.rsqrt %20 : vector<16x1xf32>
    %22 = vector.broadcast %21 : vector<16x1xf32> to vector<16x32xf32>
    %23 = arith.mulf %13, %22 : vector<16x32xf32>
    %c0_12 = arith.constant 0 : index
    %c0_13 = arith.constant 0 : index
    %24 = vector.load %arg5[%c0_12, %c0_13] : memref<1x32xf32, #tpu.memory_space<vmem>>, vector<1x32xf32>
    %25 = vector.broadcast %24 : vector<1x32xf32> to vector<16x32xf32>
    %26 = arith.mulf %23, %25 : vector<16x32xf32>
    %c0_14 = arith.constant 0 : index
    %c0_15 = arith.constant 0 : index
    %27 = vector.load %arg6[%c0_14, %c0_15] : memref<1x32xf32, #tpu.memory_space<vmem>>, vector<1x32xf32>
    %28 = vector.broadcast %27 : vector<1x32xf32> to vector<16x32xf32>
    %29 = arith.addf %26, %28 : vector<16x32xf32>
    %c0_16 = arith.constant 0 : index
    %c0_17 = arith.constant 0 : index
    %30 = vector.load %arg7[%c0_16, %c0_17] : memref<16x32xf32, #tpu.memory_space<vmem>>, vector<16x32xf32>
    tpu.vector_store %arg7[%c0_16, %c0_17], %29 {strides = array<i32>} : memref<16x32xf32, #tpu.memory_space<vmem>>, vector<16x32xf32>,
    return
  }
  func.func @transform_0(%arg0: i32) -> (i32, i32) {
    %c0_i32 = arith.constant 0 : i32
    %c0_i32_0 = arith.constant 0 : i32
    return %arg0, %c0_i32 : i32, i32
  }
  func.func @transform_1(%arg0: i32) -> (i32, i32) {
    %c0_i32 = arith.constant 0 : i32
    %c0_i32_0 = arith.constant 0 : i32
    return %arg0, %c0_i32 : i32, i32
  }
  func.func @transform_2(%arg0: i32) -> (i32, i32) {
    %c0_i32 = arith.constant 0 : i32
    %c0_i32_0 = arith.constant 0 : i32
    %c0_i32_1 = arith.constant 0 : i32
    return %c0_i32, %c0_i32_0 : i32, i32
  }
  func.func @transform_3(%arg0: i32) -> (i32, i32) {
    %c0_i32 = arith.constant 0 : i32
    %c0_i32_0 = arith.constant 0 : i32
    %c0_i32_1 = arith.constant 0 : i32
    return %c0_i32, %c0_i32_0 : i32, i32
  }
  func.func @transform_4(%arg0: i32) -> (i32, i32) {
    %c0_i32 = arith.constant 0 : i32
    %c0_i32_0 = arith.constant 0 : i32
    %c0_i32_1 = arith.constant 0 : i32
    return %c0_i32, %c0_i32_0 : i32, i32
  }
  func.func @transform_5(%arg0: i32) -> (i32, i32) {
    %c0_i32 = arith.constant 0 : i32
    %c0_i32_0 = arith.constant 0 : i32
    %c0_i32_1 = arith.constant 0 : i32
    return %c0_i32, %c0_i32_0 : i32, i32
  }
  func.func @transform_6(%arg0: i32) -> (i32, i32) {
    %c0_i32 = arith.constant 0 : i32
    %c0_i32_0 = arith.constant 0 : i32
    return %arg0, %c0_i32 : i32, i32
  }
}

module attributes {stable_mosaic.version = 11 : i64} {
  func.func @_bert_output_kernel(%arg0: i32, %arg1: memref<16x64xf32, #tpu.memory_space<vmem>>, %arg2: memref<16x32xf32, #tpu.memory_space<vmem>>, %arg3: memref<64x32xf32, #tpu.memory_space<vmem>>, %arg4: memref<1x32xf32, #tpu.memory_space<vmem>>, %arg5: memref<1x32xf32, #tpu.memory_space<vmem>>, %arg6: memref<1x32xf32, #tpu.memory_space<vmem>>, %arg7: memref<16x32xf32, #tpu.memory_space<vmem>>) attributes {dimension_semantics = [#tpu.dimension_semantics<parallel>], iteration_bounds = array<i64: 1>, scalar_prefetch = 0 : i64, scratch_operands = 0 : i64, tpu.core_type = #tpu.core_type<tc>, window_params = [{transform_indices = @transform_0, window_bounds = array<i64: 16, 64>}, {transform_indices = @transform_1, window_bounds = array<i64: 16, 32>}, {pipeline_mode = #tpu.pipeline_mode<synchronous>, transform_indices = @transform_2, window_bounds = array<i64: 64, 32>}, {pipeline_mode = #tpu.pipeline_mode<synchronous>, transform_indices = @transform_3, window_bounds = array<i64: 1, 32>}, {pipeline_mode = #tpu.pipeline_mode<synchronous>, transform_indices = @transform_4, window_bounds = array<i64: 1, 32>}, {pipeline_mode = #tpu.pipeline_mode<synchronous>, transform_indices = @transform_5, window_bounds = array<i64: 1, 32>}, {transform_indices = @transform_6, window_bounds = array<i64: 16, 32>}]} {
    %c0 = arith.constant 0 : index
    %c0_0 = arith.constant 0 : index
    %0 = vector.load %arg1[%c0, %c0_0] : memref<16x64xf32, #tpu.memory_space<vmem>>, vector<16x64xf32>
    %c0_1 = arith.constant 0 : index
    %c0_2 = arith.constant 0 : index
    %1 = vector.load %arg3[%c0_1, %c0_2] : memref<64x32xf32, #tpu.memory_space<vmem>>, vector<64x32xf32>
    %cst = arith.constant dense<0.000000e+00> : vector<16x32xf32>
    %2 = tpu.matmul %0, %1, %cst {dimension_numbers = #tpu.dot_dimension_numbers<[1], [0], [0], [1], [0, 0, 1, 1], [], []>} : vector<16x64xf32>, vector<64x32xf32>, vector<16x32xf32> -> vector<16x32xf32>
    %c0_3 = arith.constant 0 : index
    %c0_4 = arith.constant 0 : index
    %3 = vector.load %arg4[%c0_3, %c0_4] : memref<1x32xf32, #tpu.memory_space<vmem>>, vector<1x32xf32>
    %4 = vector.broadcast %3 : vector<1x32xf32> to vector<16x32xf32>
    %5 = arith.addf %2, %4 : vector<16x32xf32>
    %c0_5 = arith.constant 0 : index
    %c0_6 = arith.constant 0 : index
    %6 = vector.load %arg2[%c0_5, %c0_6] : memref<16x32xf32, #tpu.memory_space<vmem>>, vector<16x32xf32>
    %7 = arith.addf %5, %6 : vector<16x32xf32>
    %cst_7 = arith.constant dense<0.000000e+00> : vector<16xf32>
    %8 = vector.multi_reduction <add>, %7, %cst_7 [1] : vector<16x32xf32> to vector<16xf32>
    %9 = vector.shape_cast %8 : vector<16xf32> to vector<16x1xf32>
    %cst_8 = arith.constant 3.200000e+01 : f32
    %10 = vector.broadcast %cst_8 : f32 to vector<16x1xf32>
    %11 = arith.divf %9, %10 : vector<16x1xf32>
    %12 = vector.broadcast %11 : vector<16x1xf32> to vector<16x32xf32>
    %13 = arith.subf %7, %12 : vector<16x32xf32>
    %14 = arith.mulf %13, %13 : vector<16x32xf32>
    %cst_9 = arith.constant dense<0.000000e+00> : vector<16xf32>
    %15 = vector.multi_reduction <add>, %14, %cst_9 [1] : vector<16x32xf32> to vector<16xf32>
    %16 = vector.shape_cast %15 : vector<16xf32> to vector<16x1xf32>
    %cst_10 = arith.constant 3.200000e+01 : f32
    %17 = vector.broadcast %cst_10 : f32 to vector<16x1xf32>
    %18 = arith.divf %16, %17 : vector<16x1xf32>
    %cst_11 = arith.constant 9.99999996E-13 : f32
    %19 = vector.broadcast %cst_11 : f32 to vector<16x1xf32>
    %20 = arith.addf %18, %19 : vector<16x1xf32>
    %21 = math.rsqrt %20 : vector<16x1xf32>
    %22 = vector.broadcast %21 : vector<16x1xf32> to vector<16x32xf32>
    %23 = arith.mulf %13, %22 : vector<16x32xf32>
    %c0_12 = arith.constant 0 : index
    %c0_13 = arith.constant 0 : index
    %24 = vector.load %arg5[%c0_12, %c0_13] : memref<1x32xf32, #tpu.memory_space<vmem>>, vector<1x32xf32>
    %25 = vector.broadcast %24 : vector<1x32xf32> to vector<16x32xf32>
    %26 = arith.mulf %23, %25 : vector<16x32xf32>
    %c0_14 = arith.constant 0 : index
    %c0_15 = arith.constant 0 : index
    %27 = vector.load %arg6[%c0_14, %c0_15] : memref<1x32xf32, #tpu.memory_space<vmem>>, vector<1x32xf32>
    %28 = vector.broadcast %27 : vector<1x32xf32> to vector<16x32xf32>
    %29 = arith.addf %26, %28 : vector<16x32xf32>
    %c0_16 = arith.constant 0 : index
    %c0_17 = arith.constant 0 : index
    %30 = vector.load %arg7[%c0_16, %c0_17] : memref<16x32xf32, #tpu.memory_space<vmem>>, vector<16x32xf32>
    tpu.vector_store %arg7[%c0_16, %c0_17], %29 {strides = array<i32>} : memref<16x32xf32, #tpu.memory_space<vmem>>, vector<16x32xf32>,
    return
  }
  func.func @transform_0(%arg0: i32) -> (i32, i32) {
    %c0_i32 = arith.constant 0 : i32
    %c0_i32_0 = arith.constant 0 : i32
    return %arg0, %c0_i32 : i32, i32
  }
  func.func @transform_1(%arg0: i32) -> (i32, i32) {
    %c0_i32 = arith.constant 0 : i32
    %c0_i32_0 = arith.constant 0 : i32
    return %arg0, %c0_i32 : i32, i32
  }
  func.func @transform_2(%arg0: i32) -> (i32, i32) {
    %c0_i32 = arith.constant 0 : i32
    %c0_i32_0 = arith.constant 0 : i32
    %c0_i32_1 = arith.constant 0 : i32
    return %c0_i32, %c0_i32_0 : i32, i32
  }
  func.func @transform_3(%arg0: i32) -> (i32, i32) {
    %c0_i32 = arith.constant 0 : i32
    %c0_i32_0 = arith.constant 0 : i32
    %c0_i32_1 = arith.constant 0 : i32
    return %c0_i32, %c0_i32_0 : i32, i32
  }
  func.func @transform_4(%arg0: i32) -> (i32, i32) {
    %c0_i32 = arith.constant 0 : i32
    %c0_i32_0 = arith.constant 0 : i32
    %c0_i32_1 = arith.constant 0 : i32
    return %c0_i32, %c0_i32_0 : i32, i32
  }
  func.func @transform_5(%arg0: i32) -> (i32, i32) {
    %c0_i32 = arith.constant 0 : i32
    %c0_i32_0 = arith.constant 0 : i32
    %c0_i32_1 = arith.constant 0 : i32
    return %c0_i32, %c0_i32_0 : i32, i32
  }
  func.func @transform_6(%arg0: i32) -> (i32, i32) {
    %c0_i32 = arith.constant 0 : i32
    %c0_i32_0 = arith.constant 0 : i32
    return %arg0, %c0_i32 : i32, i32
  }
}

</mosaic_0001>

<llo_original>
// kernel: tpu_custom_call.1
$region0: #{tpu_custom_call.1}
  #allocation0 [shape = 'u32[]', space=smem, size = 0x4, offset = 0x4, fixed_abs, tag = 'smem constant byte address 0x4 - core index']
  #allocation1 [shape = 'u32[144,128]{1,0:T(1,128)}', space=vmem, size = 0x12000, scoped, tag = 'internal scratch']
  %s0 = inlined_call_operand.vmem [shape: f32[16,64], index: 0, kind: input, shape index: {}]
  %s1 = inlined_call_operand.vmem [shape: f32[16,32], index: 1, kind: input, shape index: {}]
  %s2 = inlined_call_operand.vmem [shape: f32[64,32], index: 2, kind: input, shape index: {}]
  %s3 = inlined_call_operand.vmem [shape: f32[1,32], index: 3, kind: input, shape index: {}]
  %s4 = inlined_call_operand.vmem [shape: f32[1,32], index: 4, kind: input, shape index: {}]
  %s5 = inlined_call_operand.vmem [shape: f32[1,32], index: 5, kind: input, shape index: {}]
  %s6 = inlined_call_operand.hbm [shape: f32[16,32], index: 6, kind: output, shape index: {}]
  %s7 = sld [smem:[#allocation0]]
  $region34: #{tpu_custom_call.1} parent=0
    _
  %s9 = ssub.s32 1, %s7
  %s10 = scalar_select 0, %s9, %s7
  $region1: #{tpu_custom_call.1} parent=0
    #allocation2 [shape = 'u8[8192]{0}', space=vmem, size = 0x2000, scoped, tag = 'output window, operand 0, single buffered']
    #allocation3 [shape = 's32[1]{0}', space=sflag, size = 0x4, scoped, tag = 'scoped memory for tpu_custom_call.1']
    %11 = vsyncpa [#allocation3], 0
    // Predicated region
    $region2: #{tpu_custom_call.1} parent=1 // pred_check
      _
    $region3: #{tpu_custom_call.1} parent=1 // pred_check_branch
      %13 = sbr.rel (0) target = $region5
    $region4: #{tpu_custom_call.1} parent=1 // pred_region
      _
    $region5: #{tpu_custom_call.1} parent=1 // pred_fallthru
      _
    // Predicated region
    $region6: #{tpu_custom_call.1} parent=1 // pred_check
      _
    $region7: #{tpu_custom_call.1} parent=1 // pred_check_branch
      %15 = sbr.rel (0) target = $region9
    $region8: #{tpu_custom_call.1} parent=1 // pred_region
      _
    $region9: #{tpu_custom_call.1} parent=1 // pred_fallthru
      _
    // Predicated region
    $region10: #{tpu_custom_call.1} parent=1 // pred_check
      _
    $region11: #{tpu_custom_call.1} parent=1 // pred_check_branch
      %17 = sbr.rel (0) target = $region13
    $region12: #{tpu_custom_call.1} parent=1 // pred_region
      _
    $region13: #{tpu_custom_call.1} parent=1 // pred_fallthru
      _
    // Predicated region
    $region14: #{tpu_custom_call.1} parent=1 // pred_check
      _
    $region15: #{tpu_custom_call.1} parent=1 // pred_check_branch
      %19 = sbr.rel (0) target = $region17
    $region16: #{tpu_custom_call.1} parent=1 // pred_region
      _
    $region17: #{tpu_custom_call.1} parent=1 // pred_fallthru
      _
    // Predicated region
    $region18: #{tpu_custom_call.1} parent=1 // pred_check
      _
    $region19: #{tpu_custom_call.1} parent=1 // pred_check_branch
      %21 = sbr.rel (0) target = $region21
    $region20: #{tpu_custom_call.1} parent=1 // pred_region
      _
    $region21: #{tpu_custom_call.1} parent=1 // pred_fallthru
      _
    // Predicated region
    $region22: #{tpu_custom_call.1} parent=1 // pred_check
      _
    $region23: #{tpu_custom_call.1} parent=1 // pred_check_branch
      %23 = sbr.rel (0) target = $region25
    $region24: #{tpu_custom_call.1} parent=1 // pred_region
      _
    $region25: #{tpu_custom_call.1} parent=1 // pred_fallthru
      _
    %v24 = vld [vmem:[%s0] sm:$0xff]
    %v25 = vld [vmem:[%s0 + $0x8] sm:$0xff]
    %v26 = vld [vmem:[%s2] sm:$0xff]
    %v27 = vld [vmem:[%s2 + $0x8] sm:$0xff]
    %v28 = vld [vmem:[%s2 + $0x10] sm:$0xff]
    %v29 = vld [vmem:[%s2 + $0x18] sm:$0xff]
    %v30 = vld [vmem:[%s2 + $0x20] sm:$0xff]
    %v31 = vld [vmem:[%s2 + $0x28] sm:$0xff]
    %v32 = vld [vmem:[%s2 + $0x30] sm:$0xff]
    %v33 = vld [vmem:[%s2 + $0x38] sm:$0xff]
    %v34 = vld [vmem:[%s3] sm:$0x1]
    %v36 = vlaneseq
    %v37 = vshrl.u32 %v36, 7
    %v38 = vsub.s32 0, %v37
    %v39 = vrot.slane %v34, %v38
    %vm41 = vcmask 523264
    %v43 = vsel %vm41, %v24, 0
    %v46 = vsel %vm41, %v25, 0
    %48 = vmatprep.subr.mxu0 0.0
    %49 = vmatpush1.msra.mxu0 %v26
    %50 = vmatprep.subr.mxu0 0.0
    %51 = vmatpush1.msra.mxu0 %v27
    %52 = vmatprep.subr.mxu0 0.0
    %53 = vmatpush1.msra.mxu0 %v28
    %54 = vmatprep.subr.mxu0 0.0
    %55 = vmatpush1.msra.mxu0 %v29
    %56 = vmatprep.subr.mxu0 0.0
    %57 = vmatpush1.msra.mxu0 %v30
    %58 = vmatprep.subr.mxu0 0.0
    %59 = vmatpush1.msra.mxu0 %v31
    %60 = vmatprep.subr.mxu0 0.0
    %61 = vmatpush1.msra.mxu0 %v32
    %62 = vmatprep.subr.mxu0 0.0
    %63 = vmatpush1.msra.mxu0 %v33
    %64 = vmatprep.subr.mxu0 0.0
    %65 = vmatpush1.msra.mxu0 0.0
    %66 = vmatprep.subr.mxu0 0.0
    %67 = vmatpush1.msra.mxu0 0.0
    %68 = vmatprep.subr.mxu0 0.0
    %69 = vmatpush1.msra.mxu0 0.0
    %70 = vmatprep.subr.mxu0 0.0
    %71 = vmatpush1.msra.mxu0 0.0
    %72 = vmatprep.subr.mxu0 0.0
    %73 = vmatpush1.msra.mxu0 0.0
    %74 = vmatprep.subr.mxu0 0.0
    %75 = vmatpush1.msra.mxu0 0.0
    %76 = vmatprep.subr.mxu0 0.0
    %77 = vmatpush1.msra.mxu0 0.0
    %78 = vmatprep.subr.mxu0 0.0
    %79 = vmatpush1.msra.mxu0 0.0
    %80 = vmatprep.subr.mxu0 0.0
    %81 = vmatpush1.msra.mxu0 0.0
    %82 = vmatprep.subr.mxu0 0.0
    %83 = vmatpush1.msra.mxu0 0.0
    %84 = vmatprep.subr.mxu0 0.0
    %85 = vmatpush1.msra.mxu0 0.0
    %86 = vmatprep.subr.mxu0 0.0
    %87 = vmatpush1.msra.mxu0 0.0
    %88 = vmatprep.subr.mxu0 0.0
    %89 = vmatpush1.msra.mxu0 0.0
    %90 = vmatprep.subr.mxu0 0.0
    %91 = vmatpush1.msra.mxu0 0.0
    %92 = vmatprep.subr.mxu0 0.0
    %93 = vmatpush1.msra.mxu0 0.0
    %94 = vmatprep.subr.mxu0 0.0
    %95 = vmatpush1.msra.mxu0 0.0
    %96 = vmatprep.subr.mxu0 0.0
    %97 = vmatpush1.msra.mxu0 0.0
    %98 = vmatprep.subr.mxu0 0.0
    %99 = vmatpush1.msra.mxu0 0.0
    %100 = vmatprep.subr.mxu0 0.0
    %101 = vmatpush1.msra.mxu0 0.0
    %102 = vmatprep.subr.mxu0 0.0
    %103 = vmatpush1.msra.mxu0 0.0
    %104 = vmatprep.subr.mxu0 0.0
    %105 = vmatpush1.msra.mxu0 0.0
    %106 = vmatprep.subr.mxu0 0.0
    %107 = vmatpush1.msra.mxu0 0.0
    %108 = vmatprep.subr.mxu0 0.0
    %109 = vmatpush1.msra.mxu0 0.0
    %110 = vmatprep.subr.mxu0 0.0
    %111 = vmatpush1.msra.mxu0 0.0
    %112 = vmatprep.mubr.f32.mxu0 0.0
    %113 = vmatmul.mubr.f32.gmra.mrb[0].mxu0 %v43
    %v114 = vpop.f32.mrb[0].mxu0
    %v115 = vadd.f32 %v39, %v114
    %v116 = vpop.f32.mrb[0].mxu0
    %117 = vmatprep.mubr.f32.mxu0 0.0
    %118 = vmatmul.mubr.f32.gmra.mrb[0].mxu0 %v46
    %v119 = vpop.f32.mrb[0].mxu0
    %v120 = vadd.f32 %v39, %v119
    %v121 = vpop.f32.mrb[0].mxu0
    %122 = vdwg.mxu0
    %v123 = vld [vmem:[%s1] sm:$0xff]
    %v124 = vld [vmem:[%s1 + $0x8] sm:$0xff]
    %v125 = vadd.f32 %v115, %v123
    %v126 = vadd.f32 %v120, %v124
    %vm127 = vcmask 261120
    %v128 = vsel %vm127, %v125, 0.0
    %129 = vadd.xlane.f32.xlu0 %v128
    %v130 = vpop.xlane.xlu0 %129
    %v131 = vsel %vm127, %v126, 0.0
    %132 = vadd.xlane.f32.xlu0 %v131
    %v133 = vpop.xlane.xlu0 %132
    %v134 = vrcp.pop 32.0
    %v135 = vmul.f32 %v130, %v134
    %v136 = vmul.f32 %v133, %v134
    %v137 = vsub.f32 %v125, %v135
    %v138 = vsub.f32 %v126, %v136
    %v139 = vmul.f32 %v137, %v137
    %v140 = vmul.f32 %v138, %v138
    %v141 = vsel %vm127, %v139, 0.0
    %142 = vadd.xlane.f32.xlu0 %v141
    %v143 = vpop.xlane.xlu0 %142
    %v144 = vsel %vm127, %v140, 0.0
    %145 = vadd.xlane.f32.xlu0 %v144
    %v146 = vpop.xlane.xlu0 %145
    %v147 = vmul.f32 %v143, %v134
    %v148 = vmul.f32 %v146, %v134
    %v149 = vadd.f32 %v147, 1e-12
    %v150 = vadd.f32 %v148, 1e-12
    %v151 = vrsqrt.pop %v149
    %v152 = vrsqrt.pop %v150
    %v153 = vmul.f32 %v137, %v151
    %v154 = vmul.f32 %v138, %v152
    %v155 = vld [vmem:[%s4] sm:$0x1]
    %v157 = vlaneseq
    %v158 = vshrl.u32 %v157, 7
    %v159 = vsub.s32 0, %v158
    %v160 = vrot.slane %v155, %v159
    %v162 = vmul.f32 %v153, %v160
    %v163 = vmul.f32 %v154, %v160
    %v164 = vld [vmem:[%s5] sm:$0x1]
    %v166 = vlaneseq
    %v167 = vshrl.u32 %v166, 7
    %v168 = vsub.s32 0, %v167
    %v169 = vrot.slane %v164, %v168
    %v171 = vadd.f32 %v162, %v169
    %v172 = vadd.f32 %v163, %v169
    %173 = vst.msk [vmem:[#allocation2] sm:$0xff] %vm127, %v171
    %174 = vst.msk [vmem:[#allocation2 + $0x8] sm:$0xff] %vm127, %v172
    // Predicated region
    $region26: #{tpu_custom_call.1} parent=1 // pred_check
      _
    $region27: #{tpu_custom_call.1} parent=1 // pred_check_branch
      %176 = sbr.rel (0) target = $region29
    $region28: #{tpu_custom_call.1} parent=1 // pred_region
      %s178 = ssub.s32 256, 256
      %179 = vsyncadd [#allocation3], %s178
      %s180 = sshll.u32 [#allocation2], 4
      %s181 = int_to_ptr.vmem [resolvable:$true] %s180
      %186 = dma.vmem_to_hbm [thread:$0]  %s181, 256, %s6, [#allocation3], 128, 128, 8
    $region29: #{tpu_custom_call.1} parent=1 // pred_fallthru
      _
    // Predicated region
    $region30: #{tpu_custom_call.1} parent=1 // pred_check
      _
    $region31: #{tpu_custom_call.1} parent=1 // pred_check_branch
      %188 = sbr.rel (0) target = $region33
    $region32: #{tpu_custom_call.1} parent=1 // pred_region
      %189 = dma.done [#allocation3], 256
    $region33: #{tpu_custom_call.1} parent=1 // pred_fallthru
      _
    %190 = vsyncpa [#allocation3], 1

// kernel: tpu_custom_call.1
$region0: #{tpu_custom_call.1}
  #allocation0 [shape = 'u32[]', space=smem, size = 0x4, offset = 0x4, fixed_abs, tag = 'smem constant byte address 0x4 - core index']
  #allocation1 [shape = 'u32[144,128]{1,0:T(1,128)}', space=vmem, size = 0x12000, scoped, tag = 'internal scratch']
  %s0 = inlined_call_operand.vmem [shape: f32[16,64], index: 0, kind: input, shape index: {}]
  %s1 = inlined_call_operand.vmem [shape: f32[16,32], index: 1, kind: input, shape index: {}]
  %s2 = inlined_call_operand.vmem [shape: f32[64,32], index: 2, kind: input, shape index: {}]
  %s3 = inlined_call_operand.vmem [shape: f32[1,32], index: 3, kind: input, shape index: {}]
  %s4 = inlined_call_operand.vmem [shape: f32[1,32], index: 4, kind: input, shape index: {}]
  %s5 = inlined_call_operand.vmem [shape: f32[1,32], index: 5, kind: input, shape index: {}]
  %s6 = inlined_call_operand.hbm [shape: f32[16,32], index: 6, kind: output, shape index: {}]
  %s7 = sld [smem:[#allocation0]]
  $region34: #{tpu_custom_call.1} parent=0
    _
  %s9 = ssub.s32 1, %s7
  %s10 = scalar_select 0, %s9, %s7
  $region1: #{tpu_custom_call.1} parent=0
    #allocation2 [shape = 'u8[8192]{0}', space=vmem, size = 0x2000, scoped, tag = 'output window, operand 0, single buffered']
    #allocation3 [shape = 's32[1]{0}', space=sflag, size = 0x4, scoped, tag = 'scoped memory for tpu_custom_call.1']
    %11 = vsyncpa [#allocation3], 0
    // Predicated region
    $region2: #{tpu_custom_call.1} parent=1 // pred_check
      _
    $region3: #{tpu_custom_call.1} parent=1 // pred_check_branch
      %13 = sbr.rel (0) target = $region5
    $region4: #{tpu_custom_call.1} parent=1 // pred_region
      _
    $region5: #{tpu_custom_call.1} parent=1 // pred_fallthru
      _
    // Predicated region
    $region6: #{tpu_custom_call.1} parent=1 // pred_check
      _
    $region7: #{tpu_custom_call.1} parent=1 // pred_check_branch
      %15 = sbr.rel (0) target = $region9
    $region8: #{tpu_custom_call.1} parent=1 // pred_region
      _
    $region9: #{tpu_custom_call.1} parent=1 // pred_fallthru
      _
    // Predicated region
    $region10: #{tpu_custom_call.1} parent=1 // pred_check
      _
    $region11: #{tpu_custom_call.1} parent=1 // pred_check_branch
      %17 = sbr.rel (0) target = $region13
    $region12: #{tpu_custom_call.1} parent=1 // pred_region
      _
    $region13: #{tpu_custom_call.1} parent=1 // pred_fallthru
      _
    // Predicated region
    $region14: #{tpu_custom_call.1} parent=1 // pred_check
      _
    $region15: #{tpu_custom_call.1} parent=1 // pred_check_branch
      %19 = sbr.rel (0) target = $region17
    $region16: #{tpu_custom_call.1} parent=1 // pred_region
      _
    $region17: #{tpu_custom_call.1} parent=1 // pred_fallthru
      _
    // Predicated region
    $region18: #{tpu_custom_call.1} parent=1 // pred_check
      _
    $region19: #{tpu_custom_call.1} parent=1 // pred_check_branch
      %21 = sbr.rel (0) target = $region21
    $region20: #{tpu_custom_call.1} parent=1 // pred_region
      _
    $region21: #{tpu_custom_call.1} parent=1 // pred_fallthru
      _
    // Predicated region
    $region22: #{tpu_custom_call.1} parent=1 // pred_check
      _
    $region23: #{tpu_custom_call.1} parent=1 // pred_check_branch
      %23 = sbr.rel (0) target = $region25
    $region24: #{tpu_custom_call.1} parent=1 // pred_region
      _
    $region25: #{tpu_custom_call.1} parent=1 // pred_fallthru
      _
    %v24 = vld [vmem:[%s0] sm:$0xff]
    %v25 = vld [vmem:[%s0 + $0x8] sm:$0xff]
    %v26 = vld [vmem:[%s2] sm:$0xff]
    %v27 = vld [vmem:[%s2 + $0x8] sm:$0xff]
    %v28 = vld [vmem:[%s2 + $0x10] sm:$0xff]
    %v29 = vld [vmem:[%s2 + $0x18] sm:$0xff]
    %v30 = vld [vmem:[%s2 + $0x20] sm:$0xff]
    %v31 = vld [vmem:[%s2 + $0x28] sm:$0xff]
    %v32 = vld [vmem:[%s2 + $0x30] sm:$0xff]
    %v33 = vld [vmem:[%s2 + $0x38] sm:$0xff]
    %v34 = vld [vmem:[%s3] sm:$0x1]
    %v36 = vlaneseq
    %v37 = vshrl.u32 %v36, 7
    %v38 = vsub.s32 0, %v37
    %v39 = vrot.slane %v34, %v38
    %vm41 = vcmask 523264
    %v43 = vsel %vm41, %v24, 0
    %v46 = vsel %vm41, %v25, 0
    %48 = vmatprep.subr.mxu0 0.0
    %49 = vmatpush1.msra.mxu0 %v26
    %50 = vmatprep.subr.mxu0 0.0
    %51 = vmatpush1.msra.mxu0 %v27
    %52 = vmatprep.subr.mxu0 0.0
    %53 = vmatpush1.msra.mxu0 %v28
    %54 = vmatprep.subr.mxu0 0.0
    %55 = vmatpush1.msra.mxu0 %v29
    %56 = vmatprep.subr.mxu0 0.0
    %57 = vmatpush1.msra.mxu0 %v30
    %58 = vmatprep.subr.mxu0 0.0
    %59 = vmatpush1.msra.mxu0 %v31
    %60 = vmatprep.subr.mxu0 0.0
    %61 = vmatpush1.msra.mxu0 %v32
    %62 = vmatprep.subr.mxu0 0.0
    %63 = vmatpush1.msra.mxu0 %v33
    %64 = vmatprep.subr.mxu0 0.0
    %65 = vmatpush1.msra.mxu0 0.0
    %66 = vmatprep.subr.mxu0 0.0
    %67 = vmatpush1.msra.mxu0 0.0
    %68 = vmatprep.subr.mxu0 0.0
    %69 = vmatpush1.msra.mxu0 0.0
    %70 = vmatprep.subr.mxu0 0.0
    %71 = vmatpush1.msra.mxu0 0.0
    %72 = vmatprep.subr.mxu0 0.0
    %73 = vmatpush1.msra.mxu0 0.0
    %74 = vmatprep.subr.mxu0 0.0
    %75 = vmatpush1.msra.mxu0 0.0
    %76 = vmatprep.subr.mxu0 0.0
    %77 = vmatpush1.msra.mxu0 0.0
    %78 = vmatprep.subr.mxu0 0.0
    %79 = vmatpush1.msra.mxu0 0.0
    %80 = vmatprep.subr.mxu0 0.0
    %81 = vmatpush1.msra.mxu0 0.0
    %82 = vmatprep.subr.mxu0 0.0
    %83 = vmatpush1.msra.mxu0 0.0
    %84 = vmatprep.subr.mxu0 0.0
    %85 = vmatpush1.msra.mxu0 0.0
    %86 = vmatprep.subr.mxu0 0.0
    %87 = vmatpush1.msra.mxu0 0.0
    %88 = vmatprep.subr.mxu0 0.0
    %89 = vmatpush1.msra.mxu0 0.0
    %90 = vmatprep.subr.mxu0 0.0
    %91 = vmatpush1.msra.mxu0 0.0
    %92 = vmatprep.subr.mxu0 0.0
    %93 = vmatpush1.msra.mxu0 0.0
    %94 = vmatprep.subr.mxu0 0.0
    %95 = vmatpush1.msra.mxu0 0.0
    %96 = vmatprep.subr.mxu0 0.0
    %97 = vmatpush1.msra.mxu0 0.0
    %98 = vmatprep.subr.mxu0 0.0
    %99 = vmatpush1.msra.mxu0 0.0
    %100 = vmatprep.subr.mxu0 0.0
    %101 = vmatpush1.msra.mxu0 0.0
    %102 = vmatprep.subr.mxu0 0.0
    %103 = vmatpush1.msra.mxu0 0.0
    %104 = vmatprep.subr.mxu0 0.0
    %105 = vmatpush1.msra.mxu0 0.0
    %106 = vmatprep.subr.mxu0 0.0
    %107 = vmatpush1.msra.mxu0 0.0
    %108 = vmatprep.subr.mxu0 0.0
    %109 = vmatpush1.msra.mxu0 0.0
    %110 = vmatprep.subr.mxu0 0.0
    %111 = vmatpush1.msra.mxu0 0.0
    %112 = vmatprep.mubr.f32.mxu0 0.0
    %113 = vmatmul.mubr.f32.gmra.mrb[0].mxu0 %v43
    %v114 = vpop.f32.mrb[0].mxu0
    %v115 = vadd.f32 %v39, %v114
    %v116 = vpop.f32.mrb[0].mxu0
    %117 = vmatprep.mubr.f32.mxu0 0.0
    %118 = vmatmul.mubr.f32.gmra.mrb[0].mxu0 %v46
    %v119 = vpop.f32.mrb[0].mxu0
    %v120 = vadd.f32 %v39, %v119
    %v121 = vpop.f32.mrb[0].mxu0
    %122 = vdwg.mxu0
    %v123 = vld [vmem:[%s1] sm:$0xff]
    %v124 = vld [vmem:[%s1 + $0x8] sm:$0xff]
    %v125 = vadd.f32 %v115, %v123
    %v126 = vadd.f32 %v120, %v124
    %vm127 = vcmask 261120
    %v128 = vsel %vm127, %v125, 0.0
    %129 = vadd.xlane.f32.xlu0 %v128
    %v130 = vpop.xlane.xlu0 %129
    %v131 = vsel %vm127, %v126, 0.0
    %132 = vadd.xlane.f32.xlu0 %v131
    %v133 = vpop.xlane.xlu0 %132
    %v134 = vrcp.pop 32.0
    %v135 = vmul.f32 %v130, %v134
    %v136 = vmul.f32 %v133, %v134
    %v137 = vsub.f32 %v125, %v135
    %v138 = vsub.f32 %v126, %v136
    %v139 = vmul.f32 %v137, %v137
    %v140 = vmul.f32 %v138, %v138
    %v141 = vsel %vm127, %v139, 0.0
    %142 = vadd.xlane.f32.xlu0 %v141
    %v143 = vpop.xlane.xlu0 %142
    %v144 = vsel %vm127, %v140, 0.0
    %145 = vadd.xlane.f32.xlu0 %v144
    %v146 = vpop.xlane.xlu0 %145
    %v147 = vmul.f32 %v143, %v134
    %v148 = vmul.f32 %v146, %v134
    %v149 = vadd.f32 %v147, 1e-12
    %v150 = vadd.f32 %v148, 1e-12
    %v151 = vrsqrt.pop %v149
    %v152 = vrsqrt.pop %v150
    %v153 = vmul.f32 %v137, %v151
    %v154 = vmul.f32 %v138, %v152
    %v155 = vld [vmem:[%s4] sm:$0x1]
    %v157 = vlaneseq
    %v158 = vshrl.u32 %v157, 7
    %v159 = vsub.s32 0, %v158
    %v160 = vrot.slane %v155, %v159
    %v162 = vmul.f32 %v153, %v160
    %v163 = vmul.f32 %v154, %v160
    %v164 = vld [vmem:[%s5] sm:$0x1]
    %v166 = vlaneseq
    %v167 = vshrl.u32 %v166, 7
    %v168 = vsub.s32 0, %v167
    %v169 = vrot.slane %v164, %v168
    %v171 = vadd.f32 %v162, %v169
    %v172 = vadd.f32 %v163, %v169
    %173 = vst.msk [vmem:[#allocation2] sm:$0xff] %vm127, %v171
    %174 = vst.msk [vmem:[#allocation2 + $0x8] sm:$0xff] %vm127, %v172
    // Predicated region
    $region26: #{tpu_custom_call.1} parent=1 // pred_check
      _
    $region27: #{tpu_custom_call.1} parent=1 // pred_check_branch
      %176 = sbr.rel (0) target = $region29
    $region28: #{tpu_custom_call.1} parent=1 // pred_region
      %s178 = ssub.s32 256, 256
      %179 = vsyncadd [#allocation3], %s178
      %s180 = sshll.u32 [#allocation2], 4
      %s181 = int_to_ptr.vmem [resolvable:$true] %s180
      %186 = dma.vmem_to_hbm [thread:$0]  %s181, 256, %s6, [#allocation3], 128, 128, 8
    $region29: #{tpu_custom_call.1} parent=1 // pred_fallthru
      _
    // Predicated region
    $region30: #{tpu_custom_call.1} parent=1 // pred_check
      _
    $region31: #{tpu_custom_call.1} parent=1 // pred_check_branch
      %188 = sbr.rel (0) target = $region33
    $region32: #{tpu_custom_call.1} parent=1 // pred_region
      %189 = dma.done [#allocation3], 256
    $region33: #{tpu_custom_call.1} parent=1 // pred_fallthru
      _
    %190 = vsyncpa [#allocation3], 1

</llo_original>
